<compile_context>
chip_gen: v7x
topology: tpu7x:2x2x1
jax: 0.10.0
libtpu: 0.0.40
codegen_flags: <defaults>
</compile_context>

<pallas_src>
import math
from functools import partial

import numpy as np
import jax
import jax.numpy as jnp
from jax.experimental import pallas as pl
from jax.experimental.pallas import tpu as pltpu


# --------------------------------------------------------------------------
# Kernels
# --------------------------------------------------------------------------

def kv_proj_kernel(x_ref, wk_ref, wv_ref, bk_ref, bv_ref, k_ref, v_ref):
    """Fused, lane-dense K/V projection for one (batch, seq-tile).

    x_ref   : (1, TS, Din)
    wk/wv   : (Din, Ep)   head-major columns, zero-padded to Ep (128-multiple)
    bk/bv   : (1, Ep)     f32
    k/v out : (1, TS, Ep) compute dtype (lane-dense stores)
    """
    f32 = jnp.float32
    x = x_ref[0]                                                  # (TS, Din)
    k_ref[0] = (jnp.dot(x, wk_ref[...], preferred_element_type=f32)
                + bk_ref[...]).astype(k_ref.dtype)
    v_ref[0] = (jnp.dot(x, wv_ref[...], preferred_element_type=f32)
                + bv_ref[...]).astype(v_ref.dtype)


def mha_attn_kernel(xq_ref, k_ref, v_ref, wq_ref, bq_ref, wo_ref, bo_ref,
                    o_ref, q_scr, acc_scr, m_scr, l_scr,
                    *, num_heads, head_dim, approx_recip):
    """One grid step = (batch b, Q-tile qi, KV-tile kv).

    xq_ref : (1, TQ, Din)   Q-tile rows of x (resident across the kv axis)
    k/v    : (1, TKV, Ep)   streamed K/V tiles (precomputed, head-major cols)
    wq     : (Din, Ep)      Q projection (softmax scale folded in), bq (1, Ep)
    wo     : (Ep, Ep)       output projection (zero-padded), bo (1, Ep)
    o_ref  : (1, TQ, Ep)    written only on the last KV step
    scratch: q_scr (TQ,Ep) compute dtype; acc_scr (TQ,Ep) f32;
             m_scr/l_scr (TQ,H) f32 online-softmax state.
    """
    f32 = jnp.float32
    H, hd = num_heads, head_dim
    cdtype = q_scr.dtype
    kv_i = pl.program_id(2)

    @pl.when(kv_i == 0)
    def _():
        # Fused lane-dense Q projection for this Q tile (done once per Q tile,
        # NOT per KV tile); online-softmax state reset.
        q_scr[...] = (jnp.dot(xq_ref[0], wq_ref[...],
                              preferred_element_type=f32)
                      + bq_ref[...]).astype(cdtype)
        m_scr[...] = jnp.full(m_scr.shape, -jnp.inf, f32)
        l_scr[...] = jnp.zeros(l_scr.shape, f32)
        acc_scr[...] = jnp.zeros(acc_scr.shape, f32)

    k_blk = k_ref[0]                                              # (TKV, Ep)
    v_blk = v_ref[0]                                              # (TKV, Ep)

    # Per-head online (flash) softmax update for this KV tile.  H is small
    # and static; temporaries die at each scratch store.
    for h in range(H):
        lo, hi = h * hd, (h + 1) * hd
        q_h = q_scr[:, lo:hi]                                     # (TQ, hd)
        k_h = k_blk[:, lo:hi]                                     # (TKV, hd)
        v_h = v_blk[:, lo:hi]                                     # (TKV, hd)
        # q k^T via dot_general contracting last dims (no explicit transpose).
        s = jax.lax.dot_general(q_h, k_h, (((1,), (1,)), ((), ())),
                                preferred_element_type=f32)       # (TQ, TKV)
        m_p = m_scr[:, h:h + 1]
        l_p = l_scr[:, h:h + 1]
        m_n = jnp.maximum(m_p, jnp.max(s, axis=-1, keepdims=True))
        alpha = jnp.exp(m_p - m_n)                                # (TQ, 1)
        p = jnp.exp(s - m_n)                                      # (TQ, TKV)
        pv = jax.lax.dot_general(p.astype(cdtype), v_h,
                                 (((1,), (0,)), ((), ())),
                                 preferred_element_type=f32)      # (TQ, hd)
        acc_scr[:, lo:hi] = alpha * acc_scr[:, lo:hi] + pv
        l_scr[:, h:h + 1] = alpha * l_p + jnp.sum(p, axis=-1, keepdims=True)
        m_scr[:, h:h + 1] = m_n

    @pl.when(kv_i == pl.num_programs(2) - 1)
    def _():
        # Softmax denominators on the EUP; weights=None, dropout p=0 -> identity.
        inv_l = pl.reciprocal(l_scr[...], approx=approx_recip)    # (TQ, H)
        for h in range(H):
            lo, hi = h * hd, (h + 1) * hd
            acc_scr[:, lo:hi] = acc_scr[:, lo:hi] * inv_l[:, h:h + 1]
        # Output projection straight from the head-major slab; single f32->
        # compute-dtype cast in the epilogue (no extra vals slab).
        o = jnp.dot(acc_scr[...].astype(cdtype), wo_ref[...],
                    preferred_element_type=f32) + bo_ref[...]
        o_ref[0] = o.astype(o_ref.dtype)


# --------------------------------------------------------------------------
# Wrapper
# --------------------------------------------------------------------------

def _round_up(a, b):
    return (a + b - 1) // b * b


def _vmem_limit_bytes(estimate_bytes):
    # >= 32 MiB (>= every generation's scoped default), 2x headroom over the
    # static estimate, capped at 48 MiB (safe vs v7x's 64 MiB physical VMEM).
    return int(min(max(32 * 1024 * 1024, 2 * estimate_bytes),
                   48 * 1024 * 1024))


def mha_forward(x, params, num_heads, *, compute_dtype=jnp.bfloat16,
                approx_recip=True, q_block=256, kv_block=512):
    """x: (B, S, Din). params: PyTorch-convention weights (qkv_w (3E,Din), ...).

    compute_dtype: MXU operand dtype (bf16 default); accumulation/softmax f32.
    q_block/kv_block: per v6e guidance sweep upward (512/1024) for long S.
    """
    B, S, Din = x.shape
    w_qkv = jnp.asarray(params["qkv_w"], jnp.float32)
    b_qkv = jnp.asarray(params["qkv_b"], jnp.float32)
    w_o = jnp.asarray(params["o_w"], jnp.float32)
    b_o = jnp.asarray(params["o_b"], jnp.float32)
    E = w_o.shape[0]
    H = num_heads
    assert E % H == 0
    hd = E // H
    scale = 1.0 / math.sqrt(hd)

    # ---- tiling (fall back to a single tile when S is not divisible) ----
    q_blk = min(q_block, S)
    if S % q_blk:
        q_blk = S
    kv_blk = min(kv_block, S)
    if S % kv_blk:
        kv_blk = S
    n_q, n_kv = S // q_blk, S // kv_blk

    # lane-dense padded feature width (multiple of 128)
    Ep = _round_up(E, 128)
    cbytes = jnp.dtype(compute_dtype).itemsize
    obytes = jnp.dtype(x.dtype).itemsize

    # ---- weight prep (PyTorch nn.Linear: y = x @ W^T + b) ----
    # Row r of w_qkv corresponds to (h, t, d) with r = h*3*hd + t*hd + d,
    # t in {0:q, 1:k, 2:v}.  Build fused (Din, Ep) weights with head-major
    # columns (c = h*hd + d), zero-padded to Ep.  Softmax scale folded into Wq/bq.
    w4 = w_qkv.reshape(H, 3, hd, Din)
    b4 = b_qkv.reshape(H, 3, hd)

    def fused_w(t, s_):
        w = jnp.transpose(w4[:, t], (2, 0, 1)).reshape(Din, E) * s_
        return jnp.pad(w, ((0, 0), (0, Ep - E))).astype(compute_dtype)

    def fused_b(t, s_):
        return jnp.pad(b4[:, t].reshape(1, E) * s_, ((0, 0), (0, Ep - E)))

    wq, wk, wv = fused_w(0, scale), fused_w(1, 1.0), fused_w(2, 1.0)
    bq, bk, bv = fused_b(0, scale), fused_b(1, 1.0), fused_b(2, 1.0)   # f32
    wo = jnp.pad(w_o.T, ((0, Ep - E), (0, Ep - E))).astype(compute_dtype)
    bo = jnp.pad(b_o, (0, Ep - E)).reshape(1, Ep)                       # f32

    x_c = x.astype(compute_dtype)

    # ------------------------------------------------------------------
    # 1) K/V projection — computed ONCE (not per Q-tile).
    # ------------------------------------------------------------------
    def kv_const(shape):
        return pl.BlockSpec(shape, lambda b, i: (0, 0),
                            pipeline_mode=pl.Buffered(1))

    kv_grid_spec = pltpu.PrefetchScalarGridSpec(
        num_scalar_prefetch=0,
        grid=(B, n_kv),
        in_specs=[
            pl.BlockSpec((1, kv_blk, Din), lambda b, i: (b, i, 0)),
            kv_const((Din, Ep)), kv_const((Din, Ep)),
            kv_const((1, Ep)), kv_const((1, Ep)),
        ],
        out_specs=[
            pl.BlockSpec((1, kv_blk, Ep), lambda b, i: (b, i, 0)),
            pl.BlockSpec((1, kv_blk, Ep), lambda b, i: (b, i, 0)),
        ],
    )
    kv_vmem_est = (2 * kv_blk * Din * cbytes            # x tile, double-buffered
                   + 2 * Din * Ep * cbytes              # wk, wv (single-buffered)
                   + 2 * Ep * 4                         # biases
                   + 2 * 2 * kv_blk * Ep * cbytes)      # k, v outputs, dbl-buffered
    kv_cost = pl.CostEstimate(
        flops=int(2 * 2 * B * S * Din * Ep),
        transcendentals=0,
        bytes_accessed=int(B * S * Din * cbytes + 2 * Din * Ep * cbytes
                           + 2 * Ep * 4 + 2 * B * S * Ep * cbytes))

    k_all, v_all = pl.pallas_call(
        kv_proj_kernel,
        out_shape=(jax.ShapeDtypeStruct((B, S, Ep), compute_dtype),
                   jax.ShapeDtypeStruct((B, S, Ep), compute_dtype)),
        grid_spec=kv_grid_spec,
        compiler_params=pltpu.CompilerParams(
            dimension_semantics=("parallel", "parallel"),
            vmem_limit_bytes=_vmem_limit_bytes(kv_vmem_est)),
        cost_estimate=kv_cost,
    )(x_c, wk, wv, bk, bv)

    # ------------------------------------------------------------------
    # 2) Flash attention + Q projection + output projection, KV streamed.
    # ------------------------------------------------------------------
    def attn_const(shape):
        return pl.BlockSpec(shape, lambda b, qi, kv: (0, 0),
                            pipeline_mode=pl.Buffered(1))

    kernel = partial(mha_attn_kernel, num_heads=H, head_dim=hd,
                     approx_recip=approx_recip)

    attn_grid_spec = pltpu.PrefetchScalarGridSpec(
        num_scalar_prefetch=0,
        grid=(B, n_q, n_kv),
        in_specs=[
            pl.BlockSpec((1, q_blk, Din), lambda b, qi, kv: (b, qi, 0)),
            pl.BlockSpec((1, kv_blk, Ep), lambda b, qi, kv: (b, kv, 0)),
            pl.BlockSpec((1, kv_blk, Ep), lambda b, qi, kv: (b, kv, 0)),
            attn_const((Din, Ep)), attn_const((1, Ep)),
            attn_const((Ep, Ep)), attn_const((1, Ep)),
        ],
        out_specs=pl.BlockSpec((1, q_blk, Ep), lambda b, qi, kv: (b, qi, 0)),
        scratch_shapes=[
            pltpu.VMEM((q_blk, Ep), compute_dtype),     # Q slab
            pltpu.VMEM((q_blk, Ep), jnp.float32),       # flash accumulator slab
            pltpu.VMEM((q_blk, H), jnp.float32),        # running max
            pltpu.VMEM((q_blk, H), jnp.float32),        # running denom
        ],
    )
    attn_vmem_est = (2 * q_blk * Din * cbytes           # xq tile, double-buffered
                     + 2 * 2 * kv_blk * Ep * cbytes     # K, V tiles, double-buffered
                     + (Din * Ep + Ep * Ep) * cbytes    # wq, wo (single-buffered)
                     + 2 * Ep * 4                       # biases
                     + 2 * q_blk * Ep * obytes          # output, double-buffered
                     + q_blk * Ep * cbytes              # q_scr
                     + q_blk * Ep * 4                   # acc_scr
                     + 2 * q_blk * 128 * 4)             # m/l (lane-padded)
    attn_cost = pl.CostEstimate(
        flops=int(2 * B * S * Din * Ep                  # Q projection (once)
                  + 4 * B * H * S * S * hd              # QK^T + PV
                  + 2 * B * S * Ep * Ep),               # output projection
        transcendentals=int(B * H * S * S),
        bytes_accessed=int(B * S * Din * cbytes
                           + n_q * 2 * B * S * Ep * cbytes   # K/V re-streamed per Q-tile
                           + (Din * Ep + Ep * Ep) * cbytes + 2 * Ep * 4
                           + B * S * Ep * obytes))

    out = pl.pallas_call(
        kernel,
        out_shape=jax.ShapeDtypeStruct((B, S, Ep), x.dtype),
        grid_spec=attn_grid_spec,
        compiler_params=pltpu.CompilerParams(
            dimension_semantics=("parallel", "parallel", "arbitrary"),
            vmem_limit_bytes=_vmem_limit_bytes(attn_vmem_est)),
        cost_estimate=attn_cost,
    )(x_c, k_all, v_all, wq, bq, wo, bo)

    return out[..., :E] if Ep != E else out


# --------------------------------------------------------------------------
# Pure-JAX reference & test
# --------------------------------------------------------------------------

def mha_reference(x, params, num_heads):
    """Pure-JAX replica of the PyTorch forward (mask/weights=None, p=0)."""
    B, S, Din = x.shape
    w_qkv, b_qkv = params["qkv_w"], params["qkv_b"]
    w_o, b_o = params["o_w"], params["o_b"]
    E = w_o.shape[0]
    H = num_heads
    hd = E // H
    qkv = x @ w_qkv.T + b_qkv                              # (B, S, 3E)
    qkv = qkv.reshape(B, S, H, 3 * hd).transpose(0, 2, 1, 3)
    q, k, v = qkv[..., :hd], qkv[..., hd:2 * hd], qkv[..., 2 * hd:]
    logits = jnp.einsum("bhqd,bhkd->bhqk", q, k) / math.sqrt(hd)
    m = jnp.max(logits, axis=-1, keepdims=True)
    e = jnp.exp(logits - m)
    attn = e / jnp.sum(e, axis=-1, keepdims=True)
    vals = jnp.einsum("bhqk,bhkd->bhqd", attn, v)
    vals = vals.transpose(0, 2, 1, 3).reshape(B, S, E)
    return vals @ w_o.T + b_o


def xavier_uniform(key, shape):
    fan_out, fan_in = shape
    bound = math.sqrt(6.0 / (fan_in + fan_out))
    return jax.random.uniform(key, shape, jnp.float32, -bound, bound)


if __name__ == "__main__":
    # small shapes consistent with the module
    B, S = 2, 8
    input_dim, embed_dim, num_heads = 16, 32, 4

    key = jax.random.PRNGKey(0)
    kx, kqkv, ko, kb1, kb2 = jax.random.split(key, 5)
    x = jax.random.normal(kx, (B, S, input_dim), jnp.float32)

    # xavier weights per MHA._reset_parameters; small nonzero biases to
    # exercise the full bias path (trained biases are arbitrary).
    params = {
        "qkv_w": xavier_uniform(kqkv, (3 * embed_dim, input_dim)),
        "qkv_b": 0.1 * jax.random.normal(kb1, (3 * embed_dim,), jnp.float32),
        "o_w": xavier_uniform(ko, (embed_dim, embed_dim)),
        "o_b": 0.1 * jax.random.normal(kb2, (embed_dim,), jnp.float32),
        # delta_mul / delta_bias exist in __init__ but are unused in forward.
    }

    ref = mha_reference(x, params, num_heads)

    # f32 operands + exact reciprocal: tight tolerance against the reference.
    out_f32 = jax.block_until_ready(
        mha_forward(x, params, num_heads,
                    compute_dtype=jnp.float32, approx_recip=False))
    np.testing.assert_allclose(np.asarray(out_f32), np.asarray(ref),
                               rtol=1e-4, atol=1e-5)

    # Default path: bf16 MXU operands + approx EUP reciprocal (f32 accumulation
    # and softmax math); loose tolerance.
    out_bf16 = jax.block_until_ready(mha_forward(x, params, num_heads))
    np.testing.assert_allclose(np.asarray(out_bf16), np.asarray(ref),
                               rtol=1e-1, atol=1e-1)

    print("KERNEL_OK")
</pallas_src>

<mosaic_0001>
module attributes {stable_mosaic.version = 11 : i64} {
  func.func @kv_proj_kernel(%arg0: i32, %arg1: i32, %arg2: memref<1x8x16xf32, #tpu.memory_space<vmem>>, %arg3: memref<16x128xf32, #tpu.memory_space<vmem>>, %arg4: memref<16x128xf32, #tpu.memory_space<vmem>>, %arg5: memref<1x128xf32, #tpu.memory_space<vmem>>, %arg6: memref<1x128xf32, #tpu.memory_space<vmem>>, %arg7: memref<1x8x128xf32, #tpu.memory_space<vmem>>, %arg8: memref<1x8x128xf32, #tpu.memory_space<vmem>>) attributes {dimension_semantics = [#tpu.dimension_semantics<parallel>, #tpu.dimension_semantics<parallel>], iteration_bounds = array<i64: 2, 1>, scalar_prefetch = 0 : i64, scratch_operands = 0 : i64, tpu.core_type = #tpu.core_type<tc>, window_params = [{transform_indices = @transform_0, window_bounds = array<i64: 1, 8, 16>}, {pipeline_mode = #tpu.pipeline_mode<synchronous>, transform_indices = @transform_1, window_bounds = array<i64: 16, 128>}, {pipeline_mode = #tpu.pipeline_mode<synchronous>, transform_indices = @transform_2, window_bounds = array<i64: 16, 128>}, {pipeline_mode = #tpu.pipeline_mode<synchronous>, transform_indices = @transform_3, window_bounds = array<i64: 1, 128>}, {pipeline_mode = #tpu.pipeline_mode<synchronous>, transform_indices = @transform_4, window_bounds = array<i64: 1, 128>}, {transform_indices = @transform_5, window_bounds = array<i64: 1, 8, 128>}, {transform_indices = @transform_6, window_bounds = array<i64: 1, 8, 128>}]} {
    %c0 = arith.constant 0 : index
    %c0_0 = arith.constant 0 : index
    %c0_1 = arith.constant 0 : index
    %0 = vector.load %arg2[%c0, %c0_0, %c0_1] : memref<1x8x16xf32, #tpu.memory_space<vmem>>, vector<1x8x16xf32>
    %1 = vector.shape_cast %0 : vector<1x8x16xf32> to vector<8x16xf32>
    %c0_2 = arith.constant 0 : index
    %c0_3 = arith.constant 0 : index
    %2 = vector.load %arg3[%c0_2, %c0_3] : memref<16x128xf32, #tpu.memory_space<vmem>>, vector<16x128xf32>
    %cst = arith.constant dense<0.000000e+00> : vector<8x128xf32>
    %3 = tpu.matmul %1, %2, %cst {dimension_numbers = #tpu.dot_dimension_numbers<[1], [0], [0], [1], [0, 0, 1, 1], [], []>} : vector<8x16xf32>, vector<16x128xf32>, vector<8x128xf32> -> vector<8x128xf32>
    %c0_4 = arith.constant 0 : index
    %c0_5 = arith.constant 0 : index
    %4 = vector.load %arg5[%c0_4, %c0_5] : memref<1x128xf32, #tpu.memory_space<vmem>>, vector<1x128xf32>
    %5 = vector.broadcast %4 : vector<1x128xf32> to vector<8x128xf32>
    %6 = arith.addf %3, %5 : vector<8x128xf32>
    %c0_6 = arith.constant 0 : index
    %c0_7 = arith.constant 0 : index
    %c0_8 = arith.constant 0 : index
    %7 = vector.load %arg7[%c0_6, %c0_7, %c0_8] : memref<1x8x128xf32, #tpu.memory_space<vmem>>, vector<1x8x128xf32>
    %8 = vector.shape_cast %7 : vector<1x8x128xf32> to vector<8x128xf32>
    %9 = vector.shape_cast %6 : vector<8x128xf32> to vector<1x8x128xf32>
    tpu.vector_store %arg7[%c0_6, %c0_7, %c0_8], %9 {strides = array<i32>} : memref<1x8x128xf32, #tpu.memory_space<vmem>>, vector<1x8x128xf32>,
    %c0_9 = arith.constant 0 : index
    %c0_10 = arith.constant 0 : index
    %10 = vector.load %arg4[%c0_9, %c0_10] : memref<16x128xf32, #tpu.memory_space<vmem>>, vector<16x128xf32>
    %cst_11 = arith.constant dense<0.000000e+00> : vector<8x128xf32>
    %11 = tpu.matmul %1, %10, %cst_11 {dimension_numbers = #tpu.dot_dimension_numbers<[1], [0], [0], [1], [0, 0, 1, 1], [], []>} : vector<8x16xf32>, vector<16x128xf32>, vector<8x128xf32> -> vector<8x128xf32>
    %c0_12 = arith.constant 0 : index
    %c0_13 = arith.constant 0 : index
    %12 = vector.load %arg6[%c0_12, %c0_13] : memref<1x128xf32, #tpu.memory_space<vmem>>, vector<1x128xf32>
    %13 = vector.broadcast %12 : vector<1x128xf32> to vector<8x128xf32>
    %14 = arith.addf %11, %13 : vector<8x128xf32>
    %c0_14 = arith.constant 0 : index
    %c0_15 = arith.constant 0 : index
    %c0_16 = arith.constant 0 : index
    %15 = vector.load %arg8[%c0_14, %c0_15, %c0_16] : memref<1x8x128xf32, #tpu.memory_space<vmem>>, vector<1x8x128xf32>
    %16 = vector.shape_cast %15 : vector<1x8x128xf32> to vector<8x128xf32>
    %17 = vector.shape_cast %14 : vector<8x128xf32> to vector<1x8x128xf32>
    tpu.vector_store %arg8[%c0_14, %c0_15, %c0_16], %17 {strides = array<i32>} : memref<1x8x128xf32, #tpu.memory_space<vmem>>, vector<1x8x128xf32>,
    return
  }
  func.func @transform_0(%arg0: i32, %arg1: i32) -> (i32, i32, i32) {
    %c0_i32 = arith.constant 0 : i32
    %c0_i32_0 = arith.constant 0 : i32
    return %arg0, %arg1, %c0_i32 : i32, i32, i32
  }
  func.func @transform_1(%arg0: i32, %arg1: i32) -> (i32, i32) {
    %c0_i32 = arith.constant 0 : i32
    %c0_i32_0 = arith.constant 0 : i32
    %c0_i32_1 = arith.constant 0 : i32
    return %c0_i32, %c0_i32_0 : i32, i32
  }
  func.func @transform_2(%arg0: i32, %arg1: i32) -> (i32, i32) {
    %c0_i32 = arith.constant 0 : i32
    %c0_i32_0 = arith.constant 0 : i32
    %c0_i32_1 = arith.constant 0 : i32
    return %c0_i32, %c0_i32_0 : i32, i32
  }
  func.func @transform_3(%arg0: i32, %arg1: i32) -> (i32, i32) {
    %c0_i32 = arith.constant 0 : i32
    %c0_i32_0 = arith.constant 0 : i32
    %c0_i32_1 = arith.constant 0 : i32
    return %c0_i32, %c0_i32_0 : i32, i32
  }
  func.func @transform_4(%arg0: i32, %arg1: i32) -> (i32, i32) {
    %c0_i32 = arith.constant 0 : i32
    %c0_i32_0 = arith.constant 0 : i32
    %c0_i32_1 = arith.constant 0 : i32
    return %c0_i32, %c0_i32_0 : i32, i32
  }
  func.func @transform_5(%arg0: i32, %arg1: i32) -> (i32, i32, i32) {
    %c0_i32 = arith.constant 0 : i32
    %c0_i32_0 = arith.constant 0 : i32
    return %arg0, %arg1, %c0_i32 : i32, i32, i32
  }
  func.func @transform_6(%arg0: i32, %arg1: i32) -> (i32, i32, i32) {
    %c0_i32 = arith.constant 0 : i32
    %c0_i32_0 = arith.constant 0 : i32
    return %arg0, %arg1, %c0_i32 : i32, i32, i32
  }
}

</mosaic_0001>

<llo_original>
// kernel: tpu_custom_call.1
$region0: #{tpu_custom_call.1}
  #allocation0 [shape = 'u32[]', space=smem, size = 0x4, offset = 0x4, fixed_abs, tag = 'smem constant byte address 0x4 - core index']
  #allocation1 [shape = 'u32[144,128]{1,0:T(1,128)}', space=vmem, size = 0x12000, scoped, tag = 'internal scratch']
  %s0 = inlined_call_operand.hbm [shape: f32[2,8,16], index: 0, kind: input, shape index: {}]
  %s1 = inlined_call_operand.hbm [shape: f32[16,128], index: 1, kind: input, shape index: {}]
  %s2 = inlined_call_operand.hbm [shape: f32[16,128], index: 2, kind: input, shape index: {}]
  %s3 = inlined_call_operand.vmem [shape: f32[1,128], index: 3, kind: input, shape index: {}]
  %s4 = inlined_call_operand.vmem [shape: f32[1,128], index: 4, kind: input, shape index: {}]
  %s5 = inlined_call_operand.hbm [shape: f32[2,8,128], index: 5, kind: output, shape index: {0}]
  %s6 = inlined_call_operand.hbm [shape: f32[2,8,128], index: 6, kind: output, shape index: {1}]
  %7 = xla_tuple %s5, %s6
  %s8 = sld [smem:[#allocation0]]
  $region73: #{tpu_custom_call.1} parent=0
    _
  %s10 = ssub.s32 1, %s8
  %s11 = scalar_select 0, %s10, %s8
  $region1: #{tpu_custom_call.1} parent=0
    #allocation2 [shape = 'u8[8192]{0}', space=vmem, size = 0x2000, scoped, tag = 'input window, operand 0']
    #allocation3 [shape = 's32[2]{0}', space=sflag, size = 0x8, scoped, tag = 'scoped memory for tpu_custom_call.1']
    #allocation4 [shape = 's32[2]{0}', space=sflag, size = 0x8, scoped, tag = 'scoped memory for tpu_custom_call.1']
    #allocation5 [shape = 'u8[8192]{0}', space=vmem, size = 0x2000, scoped, tag = 'input window, operand 1, single buffered']
    #allocation6 [shape = 's32[1]{0}', space=sflag, size = 0x4, scoped, tag = 'scoped memory for tpu_custom_call.1']
    #allocation7 [shape = 'u8[8192]{0}', space=vmem, size = 0x2000, scoped, tag = 'input window, operand 2, single buffered']
    #allocation8 [shape = 'u8[8192]{0}', space=vmem, size = 0x2000, scoped, tag = 'output window, operand 0']
    #allocation9 [shape = 'u8[8192]{0}', space=vmem, size = 0x2000, scoped, tag = 'output window, operand 1']
    #allocation10 [shape = 's32[2]{0}', space=sflag, size = 0x8, scoped, tag = 'scoped memory for tpu_custom_call.1']
    %12 = vsyncpa [#allocation3], 0
    %s13 = scalar_lea.sflag [#allocation3], 1
    %14 = vsyncpa %s13, 0
    %15 = vsyncpa [#allocation6], 0
    %16 = vsyncpa [#allocation4], 0
    %s17 = scalar_lea.sflag [#allocation4], 1
    %18 = vsyncpa %s17, 0
    %19 = vsyncpa [#allocation10], 0
    %s20 = scalar_lea.sflag [#allocation10], 1
    %21 = vsyncpa %s20, 0
    loop: start=0, step=1, limit=4
    $region2: #{tpu_custom_call.1} parent=1 // loop_pre_header
      _
    $region3: #{tpu_custom_call.1} parent=1 // loop_header
      %s23 = sphi 0, %s27
      %p24 = scmp.ge.s32.totalorder %s23, 4
      %s30 = sphi 0, %s42
      %s31 = sphi 0, %s38
      %s32 = sphi 0, %s30
      %s33 = sphi 0, %s31
      %s34 = sphi 0, %s32
      %s35 = sphi 0, %s33
      %s47 = sphi 0, %s49
      %s50 = sphi 0, %s47
      %s51 = sphi 0, %s50
      %s67 = sphi 0, %s51
      %s71 = sphi 0, %s71
      %s73 = sphi 0, %s71
      %s74 = sphi 0, %s73
      %s88 = sphi 0, %s74
      %s92 = sphi 0, %s92
      %s94 = sphi 0, %s92
      %s95 = sphi 0, %s94
      %s109 = sphi 0, %s95
      %s113 = sphi 0, %s113
      %s115 = sphi 0, %s113
      %s116 = sphi 0, %s115
      %s130 = sphi 0, %s116
      %s134 = sphi 0, %s134
      %s136 = sphi 0, %s134
      %s137 = sphi 0, %s136
      %s151 = sphi 0, %s137
      %s159 = sphi 0, %s161
      %s162 = sphi 0, %s159
      %s163 = sphi 0, %s162
      %s179 = sphi 0, %s163
      %s187 = sphi 0, %s189
      %s190 = sphi 0, %s187
      %s191 = sphi 0, %s190
      %s207 = sphi 0, %s191
    $region4: #{tpu_custom_call.1} parent=1 // loop_header_branch
      %26 = sbr.rel (%p24) target = $region8
    $region5: #{tpu_custom_call.1} parent=1 // loop_body
      %s28 = ssub.s32 %s23, 1
      %s29 = ssub.s32 %s23, 2
      %s36 = sadd.s32 1, %s31
      %p37 = scmp.ge.s32.totalorder %s36, 1
      %s38 = scalar_select %p37, 0, %s36
      %s39 = sadd.s32 1, %s30
      %s40 = scalar_select %p37, %s39, %s30
      %p41 = scmp.ge.s32.totalorder %s40, 2
      %s42 = scalar_select %p41, 0, %s40
      %s43 = ssub.s32 %s30, %s42
      %s44 = ssub.s32 %s31, %s38
      %s45 = sor.u32 %s43, %s44
      %p46 = scmp.eq.s32.totalorder %s45, 0
      %s48 = sadd.s32 %s47, 1
      %s49 = scalar_select %p46, %s47, %s48
      %p52 = pneg %p46
      %p53 = scmp.eq.s32.totalorder %s23, 1
      %p54 = por %p52, %p53
      %p55 = scmp.ne.s32.totalorder %s47, %s50
      %p56 = scmp.eq.s32.totalorder %s23, 0
      %p57 = por %p55, %p56
      %p58 = scmp.ne.s32.totalorder %s47, %s50
      %p59 = scmp.eq.s32.totalorder %s28, 1
      %p60 = por %p58, %p59
      %p61 = scmp.ne.s32.totalorder %s50, %s51
      %p62 = scmp.eq.s32.totalorder %s28, 0
      %p63 = por %p61, %p62
      %p64 = scmp.ne.s32.totalorder %s50, %s51
      %p65 = scmp.eq.s32.totalorder %s29, 1
      %p66 = por %p64, %p65
      %p68 = scmp.ne.s32.totalorder %s51, %s67
      %p69 = scmp.eq.s32.totalorder %s29, 0
      %p70 = por %p68, %p69
      %s72 = sadd.s32 %s71, 1
      %p75 = scmp.eq.s32.totalorder %s23, 1
      %p76 = scmp.ne.s32.totalorder %s71, %s73
      %p77 = scmp.eq.s32.totalorder %s23, 0
      %p78 = por %p76, %p77
      %p79 = scmp.ne.s32.totalorder %s71, %s73
      %p80 = scmp.eq.s32.totalorder %s28, 1
      %p81 = por %p79, %p80
      %p82 = scmp.ne.s32.totalorder %s73, %s74
      %p83 = scmp.eq.s32.totalorder %s28, 0
      %p84 = por %p82, %p83
      %p85 = scmp.ne.s32.totalorder %s73, %s74
      %p86 = scmp.eq.s32.totalorder %s29, 1
      %p87 = por %p85, %p86
      %p89 = scmp.ne.s32.totalorder %s74, %s88
      %p90 = scmp.eq.s32.totalorder %s29, 0
      %p91 = por %p89, %p90
      %s93 = sadd.s32 %s92, 1
      %p96 = scmp.eq.s32.totalorder %s23, 1
      %p97 = scmp.ne.s32.totalorder %s92, %s94
      %p98 = scmp.eq.s32.totalorder %s23, 0
      %p99 = por %p97, %p98
      %p100 = scmp.ne.s32.totalorder %s92, %s94
      %p101 = scmp.eq.s32.totalorder %s28, 1
      %p102 = por %p100, %p101
      %p103 = scmp.ne.s32.totalorder %s94, %s95
      %p104 = scmp.eq.s32.totalorder %s28, 0
      %p105 = por %p103, %p104
      %p106 = scmp.ne.s32.totalorder %s94, %s95
      %p107 = scmp.eq.s32.totalorder %s29, 1
      %p108 = por %p106, %p107
      %p110 = scmp.ne.s32.totalorder %s95, %s109
      %p111 = scmp.eq.s32.totalorder %s29, 0
      %p112 = por %p110, %p111
      %s114 = sadd.s32 %s113, 1
      %p117 = scmp.eq.s32.totalorder %s23, 1
      %p118 = scmp.ne.s32.totalorder %s113, %s115
      %p119 = scmp.eq.s32.totalorder %s23, 0
      %p120 = por %p118, %p119
      %p121 = scmp.ne.s32.totalorder %s113, %s115
      %p122 = scmp.eq.s32.totalorder %s28, 1
      %p123 = por %p121, %p122
      %p124 = scmp.ne.s32.totalorder %s115, %s116
      %p125 = scmp.eq.s32.totalorder %s28, 0
      %p126 = por %p124, %p125
      %p127 = scmp.ne.s32.totalorder %s115, %s116
      %p128 = scmp.eq.s32.totalorder %s29, 1
      %p129 = por %p127, %p128
      %p131 = scmp.ne.s32.totalorder %s116, %s130
      %p132 = scmp.eq.s32.totalorder %s29, 0
      %p133 = por %p131, %p132
      %s135 = sadd.s32 %s134, 1
      %p138 = scmp.eq.s32.totalorder %s23, 1
      %p139 = scmp.ne.s32.totalorder %s134, %s136
      %p140 = scmp.eq.s32.totalorder %s23, 0
      %p141 = por %p139, %p140
      %p142 = scmp.ne.s32.totalorder %s134, %s136
      %p143 = scmp.eq.s32.totalorder %s28, 1
      %p144 = por %p142, %p143
      %p145 = scmp.ne.s32.totalorder %s136, %s137
      %p146 = scmp.eq.s32.totalorder %s28, 0
      %p147 = por %p145, %p146
      %p148 = scmp.ne.s32.totalorder %s136, %s137
      %p149 = scmp.eq.s32.totalorder %s29, 1
      %p150 = por %p148, %p149
      %p152 = scmp.ne.s32.totalorder %s137, %s151
      %p153 = scmp.eq.s32.totalorder %s29, 0
      %p154 = por %p152, %p153
      %s155 = ssub.s32 %s30, %s42
      %s156 = ssub.s32 %s31, %s38
      %s157 = sor.u32 %s155, %s156
      %p158 = scmp.eq.s32.totalorder %s157, 0
      %s160 = sadd.s32 %s159, 1
      %s161 = scalar_select %p158, %s159, %s160
      %p164 = pneg %p158
      %p165 = scmp.eq.s32.totalorder %s23, 1
      %p166 = por %p164, %p165
      %p167 = scmp.ne.s32.totalorder %s159, %s162
      %p168 = scmp.eq.s32.totalorder %s23, 0
      %p169 = por %p167, %p168
      %p170 = scmp.ne.s32.totalorder %s159, %s162
      %p171 = scmp.eq.s32.totalorder %s28, 1
      %p172 = por %p170, %p171
      %p173 = scmp.ne.s32.totalorder %s162, %s163
      %p174 = scmp.eq.s32.totalorder %s28, 0
      %p175 = por %p173, %p174
      %p176 = scmp.ne.s32.totalorder %s162, %s163
      %p177 = scmp.eq.s32.totalorder %s29, 1
      %p178 = por %p176, %p177
      %p180 = scmp.ne.s32.totalorder %s163, %s179
      %p181 = scmp.eq.s32.totalorder %s29, 0
      %p182 = por %p180, %p181
      %s183 = ssub.s32 %s30, %s42
      %s184 = ssub.s32 %s31, %s38
      %s185 = sor.u32 %s183, %s184
      %p186 = scmp.eq.s32.totalorder %s185, 0
      %s188 = sadd.s32 %s187, 1
      %s189 = scalar_select %p186, %s187, %s188
      %p192 = pneg %p186
      %p193 = scmp.eq.s32.totalorder %s23, 1
      %p194 = por %p192, %p193
      %p195 = scmp.ne.s32.totalorder %s187, %s190
      %p196 = scmp.eq.s32.totalorder %s23, 0
      %p197 = por %p195, %p196
      %p198 = scmp.ne.s32.totalorder %s187, %s190
      %p199 = scmp.eq.s32.totalorder %s28, 1
      %p200 = por %p198, %p199
      %p201 = scmp.ne.s32.totalorder %s190, %s191
      %p202 = scmp.eq.s32.totalorder %s28, 0
      %p203 = por %p201, %p202
      %p204 = scmp.ne.s32.totalorder %s190, %s191
      %p205 = scmp.eq.s32.totalorder %s29, 1
      %p206 = por %p204, %p205
      %p208 = scmp.ne.s32.totalorder %s191, %s207
      %p209 = scmp.eq.s32.totalorder %s29, 0
      %p210 = por %p208, %p209
      %p211 = scmp.le.s32.totalorder 1, %s23
      %p212 = scmp.lt.s32.totalorder %s23, 3
      %p213 = pnand %p211, %p212
      %p214 = pneg %p213
      // Predicated region
      $region9: #{tpu_custom_call.1} parent=5 // pred_check
        _
      $region10: #{tpu_custom_call.1} parent=5 // pred_check_branch
        %216 = sbr.rel (%p213) target = $region12
      $region11: #{tpu_custom_call.1} parent=5 // pred_region
        %s217 = ssub.s32 %s23, 1
        // Predicated region
        $region13: #{tpu_custom_call.1} parent=11 // pred_check
          %p218 = pneg %p84
        $region14: #{tpu_custom_call.1} parent=11 // pred_check_branch
          %220 = sbr.rel (%p218) target = $region16
        $region15: #{tpu_custom_call.1} parent=11 // pred_region
          %s222 = ssub.s32 256, 256
          %223 = vsyncadd [#allocation6], %s222
          %s224 = sshll.u32 [#allocation5], 4
          %s225 = int_to_ptr.vmem [resolvable:$true] %s224
          %230 = dma.hbm_to_vmem [thread:$0]  %s1, 256, %s225, [#allocation6], 128, 128, 8
        $region16: #{tpu_custom_call.1} parent=11 // pred_fallthru
          _
        // Predicated region
        $region17: #{tpu_custom_call.1} parent=11 // pred_check
          %p231 = pneg %p105
        $region18: #{tpu_custom_call.1} parent=11 // pred_check_branch
          %233 = sbr.rel (%p231) target = $region20
        $region19: #{tpu_custom_call.1} parent=11 // pred_region
          %s235 = ssub.s32 256, 256
          %236 = vsyncadd [#allocation6], %s235
          %s237 = sshll.u32 [#allocation7], 4
          %s238 = int_to_ptr.vmem [resolvable:$true] %s237
          %243 = dma.hbm_to_vmem [thread:$0]  %s2, 256, %s238, [#allocation6], 128, 128, 8
        $region20: #{tpu_custom_call.1} parent=11 // pred_fallthru
          _
        // Predicated region
        $region21: #{tpu_custom_call.1} parent=11 // pred_check
          %p244 = pneg %p126
        $region22: #{tpu_custom_call.1} parent=11 // pred_check_branch
          %246 = sbr.rel (%p244) target = $region24
        $region23: #{tpu_custom_call.1} parent=11 // pred_region
          _
        $region24: #{tpu_custom_call.1} parent=11 // pred_fallthru
          _
        // Predicated region
        $region25: #{tpu_custom_call.1} parent=11 // pred_check
          %p247 = pneg %p147
        $region26: #{tpu_custom_call.1} parent=11 // pred_check_branch
          %249 = sbr.rel (%p247) target = $region28
        $region27: #{tpu_custom_call.1} parent=11 // pred_region
          _
        $region28: #{tpu_custom_call.1} parent=11 // pred_fallthru
          _
      $region12: #{tpu_custom_call.1} parent=5 // pred_fallthru
        _
      %p250 = scmp.lt.s32.totalorder %s23, 2
      // Predicated region
      $region29: #{tpu_custom_call.1} parent=5 // pred_check
        %p251 = pneg %p250
      $region30: #{tpu_custom_call.1} parent=5 // pred_check_branch
        %253 = sbr.rel (%p251) target = $region32
      $region31: #{tpu_custom_call.1} parent=5 // pred_region
        // Predicated region
        $region33: #{tpu_custom_call.1} parent=31 // pred_check
          %p254 = pneg %p57
        $region34: #{tpu_custom_call.1} parent=31 // pred_check_branch
          %256 = sbr.rel (%p254) target = $region36
        $region35: #{tpu_custom_call.1} parent=31 // pred_region
          %s257 = sand.u32 %s47, 1
          %s258 = scalar_lea.sflag [#allocation3], %s257
          %s259 = sand.u32 %s47, 1
          %s260 = smul.addr %s259, 8
          %s261 = scalar_lea.vmem [#allocation2], %s260
          %s263 = ssub.s32 128, 128
          %264 = vsyncadd %s258, %s263
          %s265 = sadd.s32 %s31, %s30
          %s266 = smul.addr %s265, 128
          %s267 = scalar_lea.hbm %s0, %s266
          %s269 = sshll.u32 %s261, 4
          %s270 = int_to_ptr.vmem [resolvable:$true] %s269
          %272 = dma.hbm_to_vmem [thread:$0]  %s267, 128, %s270, %s258
        $region36: #{tpu_custom_call.1} parent=31 // pred_fallthru
          _
      $region32: #{tpu_custom_call.1} parent=5 // pred_fallthru
        _
      %p273 = scmp.le.s32.totalorder 1, %s23
      %p274 = scmp.lt.s32.totalorder %s23, 3
      %p275 = pnand %p273, %p274
      %p276 = pneg %p275
      // Predicated region
      $region37: #{tpu_custom_call.1} parent=5 // pred_check
        _
      $region38: #{tpu_custom_call.1} parent=5 // pred_check_branch
        %278 = sbr.rel (%p275) target = $region40
      $region39: #{tpu_custom_call.1} parent=5 // pred_region
        %s279 = ssub.s32 %s23, 1
        %s280 = sand.u32 %s50, 1
        %s281 = scalar_lea.sflag [#allocation3], %s280
        %s282 = sand.u32 %s50, 1
        %s283 = smul.addr %s282, 8
        %s284 = scalar_lea.vmem [#allocation2], %s283
        // Predicated region
        $region41: #{tpu_custom_call.1} parent=39 // pred_check
          %p285 = pneg %p63
        $region42: #{tpu_custom_call.1} parent=39 // pred_check_branch
          %287 = sbr.rel (%p285) target = $region44
        $region43: #{tpu_custom_call.1} parent=39 // pred_region
          %288 = dma.done %s281, 128
        $region44: #{tpu_custom_call.1} parent=39 // pred_fallthru
          _
        // Predicated region
        $region45: #{tpu_custom_call.1} parent=39 // pred_check
          %p289 = pneg %p84
        $region46: #{tpu_custom_call.1} parent=39 // pred_check_branch
          %291 = sbr.rel (%p289) target = $region48
        $region47: #{tpu_custom_call.1} parent=39 // pred_region
          %292 = dma.done [#allocation6], 256
        $region48: #{tpu_custom_call.1} parent=39 // pred_fallthru
          _
        // Predicated region
        $region49: #{tpu_custom_call.1} parent=39 // pred_check
          %p293 = pneg %p105
        $region50: #{tpu_custom_call.1} parent=39 // pred_check_branch
          %295 = sbr.rel (%p293) target = $region52
        $region51: #{tpu_custom_call.1} parent=39 // pred_region
          %296 = dma.done [#allocation6], 256
        $region52: #{tpu_custom_call.1} parent=39 // pred_fallthru
          _
        %s297 = sand.u32 %s50, 1
        %s298 = scalar_lea.sflag [#allocation3], %s297
        %s299 = sand.u32 %s50, 1
        %s300 = smul.addr %s299, 8
        %s301 = scalar_lea.vmem [#allocation2], %s300
        %p302 = pneg %p63
        %p303 = pneg %p60
        %p304 = pneg %p84
        %p305 = pneg %p81
        %p306 = pneg %p105
        %p307 = pneg %p102
        %p308 = pneg %p126
        %p309 = pneg %p123
        %p310 = pneg %p147
        %p311 = pneg %p144
        %p312 = pneg %p175
        %p313 = pneg %p172
        %s314 = sand.u32 %s162, 1
        %s315 = scalar_lea.sflag [#allocation4], %s314
        %s316 = sand.u32 %s162, 1
        %s317 = smul.addr %s316, 8
        %s318 = scalar_lea.vmem [#allocation8], %s317
        %p319 = pneg %p203
        %p320 = pneg %p200
        %s321 = sand.u32 %s190, 1
        %s322 = scalar_lea.sflag [#allocation10], %s321
        %s323 = sand.u32 %s190, 1
        %s324 = smul.addr %s323, 8
        %s325 = scalar_lea.vmem [#allocation9], %s324
        %v326 = vld [vmem:[%s284] sm:$0xff]
        %v327 = vld [vmem:[#allocation5] sm:$0xff]
        %v328 = vld [vmem:[#allocation5 + $0x8] sm:$0xff]
        %v329 = vld [vmem:[%s3] sm:$0x1]
        %v331 = vlaneseq
        %v332 = vshrl.u32 %v331, 7
        %v333 = vsub.s32 0, %v332
        %v334 = vrot.slane %v329, %v333
        %vm336 = vcmask 130048
        %v338 = vsel %vm336, %v326, 0
        %340 = vmatprep.subr.mxu0 0.0
        %341 = vmatpush1.msra.mxu0 %v327
        %342 = vmatprep.subr.mxu0 0.0
        %343 = vmatpush1.msra.mxu0 %v328
        %344 = vmatprep.subr.mxu0 0.0
        %345 = vmatpush1.msra.mxu0 0.0
        %346 = vmatprep.subr.mxu0 0.0
        %347 = vmatpush1.msra.mxu0 0.0
        %348 = vmatprep.subr.mxu0 0.0
        %349 = vmatpush1.msra.mxu0 0.0
        %350 = vmatprep.subr.mxu0 0.0
        %351 = vmatpush1.msra.mxu0 0.0
        %352 = vmatprep.subr.mxu0 0.0
        %353 = vmatpush1.msra.mxu0 0.0
        %354 = vmatprep.subr.mxu0 0.0
        %355 = vmatpush1.msra.mxu0 0.0
        %356 = vmatprep.subr.mxu0 0.0
        %357 = vmatpush1.msra.mxu0 0.0
        %358 = vmatprep.subr.mxu0 0.0
        %359 = vmatpush1.msra.mxu0 0.0
        %360 = vmatprep.subr.mxu0 0.0
        %361 = vmatpush1.msra.mxu0 0.0
        %362 = vmatprep.subr.mxu0 0.0
        %363 = vmatpush1.msra.mxu0 0.0
        %364 = vmatprep.subr.mxu0 0.0
        %365 = vmatpush1.msra.mxu0 0.0
        %366 = vmatprep.subr.mxu0 0.0
        %367 = vmatpush1.msra.mxu0 0.0
        %368 = vmatprep.subr.mxu0 0.0
        %369 = vmatpush1.msra.mxu0 0.0
        %370 = vmatprep.subr.mxu0 0.0
        %371 = vmatpush1.msra.mxu0 0.0
        %372 = vmatprep.subr.mxu0 0.0
        %373 = vmatpush1.msra.mxu0 0.0
        %374 = vmatprep.subr.mxu0 0.0
        %375 = vmatpush1.msra.mxu0 0.0
        %376 = vmatprep.subr.mxu0 0.0
        %377 = vmatpush1.msra.mxu0 0.0
        %378 = vmatprep.subr.mxu0 0.0
        %379 = vmatpush1.msra.mxu0 0.0
        %380 = vmatprep.subr.mxu0 0.0
        %381 = vmatpush1.msra.mxu0 0.0
        %382 = vmatprep.subr.mxu0 0.0
        %383 = vmatpush1.msra.mxu0 0.0
        %384 = vmatprep.subr.mxu0 0.0
        %385 = vmatpush1.msra.mxu0 0.0
        %386 = vmatprep.subr.mxu0 0.0
        %387 = vmatpush1.msra.mxu0 0.0
        %388 = vmatprep.subr.mxu0 0.0
        %389 = vmatpush1.msra.mxu0 0.0
        %390 = vmatprep.subr.mxu0 0.0
        %391 = vmatpush1.msra.mxu0 0.0
        %392 = vmatprep.subr.mxu0 0.0
        %393 = vmatpush1.msra.mxu0 0.0
        %394 = vmatprep.subr.mxu0 0.0
        %395 = vmatpush1.msra.mxu0 0.0
        %396 = vmatprep.subr.mxu0 0.0
        %397 = vmatpush1.msra.mxu0 0.0
        %398 = vmatprep.subr.mxu0 0.0
        %399 = vmatpush1.msra.mxu0 0.0
        %400 = vmatprep.subr.mxu0 0.0
        %401 = vmatpush1.msra.mxu0 0.0
        %402 = vmatprep.subr.mxu0 0.0
        %403 = vmatpush1.msra.mxu0 0.0
        %404 = vmatprep.mubr.f32.mxu0 0.0
        %405 = vmatmul.mubr.f32.gmra.mrb[0].mxu0 %v338
        %v406 = vpop.f32.mrb[0].mxu0
        %v407 = vadd.f32 %v334, %v406
        %v408 = vpop.f32.mrb[0].mxu0
        %409 = vdwg.mxu0
        %410 = vst [vmem:[%s318] sm:$0xff] %v407
        %v411 = vld [vmem:[#allocation7] sm:$0xff]
        %v412 = vld [vmem:[#allocation7 + $0x8] sm:$0xff]
        %v413 = vld [vmem:[%s4] sm:$0x1]
        %v415 = vlaneseq
        %v416 = vshrl.u32 %v415, 7
        %v417 = vsub.s32 0, %v416
        %v418 = vrot.slane %v413, %v417
        %420 = vmatprep.subr.mxu0 0.0
        %421 = vmatpush1.msra.mxu0 %v411
        %422 = vmatprep.subr.mxu0 0.0
        %423 = vmatpush1.msra.mxu0 %v412
        %424 = vmatprep.subr.mxu0 0.0
        %425 = vmatpush1.msra.mxu0 0.0
        %426 = vmatprep.subr.mxu0 0.0
        %427 = vmatpush1.msra.mxu0 0.0
        %428 = vmatprep.subr.mxu0 0.0
        %429 = vmatpush1.msra.mxu0 0.0
        %430 = vmatprep.subr.mxu0 0.0
        %431 = vmatpush1.msra.mxu0 0.0
        %432 = vmatprep.subr.mxu0 0.0
        %433 = vmatpush1.msra.mxu0 0.0
        %434 = vmatprep.subr.mxu0 0.0
        %435 = vmatpush1.msra.mxu0 0.0
        %436 = vmatprep.subr.mxu0 0.0
        %437 = vmatpush1.msra.mxu0 0.0
        %438 = vmatprep.subr.mxu0 0.0
        %439 = vmatpush1.msra.mxu0 0.0
        %440 = vmatprep.subr.mxu0 0.0
        %441 = vmatpush1.msra.mxu0 0.0
        %442 = vmatprep.subr.mxu0 0.0
        %443 = vmatpush1.msra.mxu0 0.0
        %444 = vmatprep.subr.mxu0 0.0
        %445 = vmatpush1.msra.mxu0 0.0
        %446 = vmatprep.subr.mxu0 0.0
        %447 = vmatpush1.msra.mxu0 0.0
        %448 = vmatprep.subr.mxu0 0.0
        %449 = vmatpush1.msra.mxu0 0.0
        %450 = vmatprep.subr.mxu0 0.0
        %451 = vmatpush1.msra.mxu0 0.0
        %452 = vmatprep.subr.mxu0 0.0
        %453 = vmatpush1.msra.mxu0 0.0
        %454 = vmatprep.subr.mxu0 0.0
        %455 = vmatpush1.msra.mxu0 0.0
        %456 = vmatprep.subr.mxu0 0.0
        %457 = vmatpush1.msra.mxu0 0.0
        %458 = vmatprep.subr.mxu0 0.0
        %459 = vmatpush1.msra.mxu0 0.0
        %460 = vmatprep.subr.mxu0 0.0
        %461 = vmatpush1.msra.mxu0 0.0
        %462 = vmatprep.subr.mxu0 0.0
        %463 = vmatpush1.msra.mxu0 0.0
        %464 = vmatprep.subr.mxu0 0.0
        %465 = vmatpush1.msra.mxu0 0.0
        %466 = vmatprep.subr.mxu0 0.0
        %467 = vmatpush1.msra.mxu0 0.0
        %468 = vmatprep.subr.mxu0 0.0
        %469 = vmatpush1.msra.mxu0 0.0
        %470 = vmatprep.subr.mxu0 0.0
        %471 = vmatpush1.msra.mxu0 0.0
        %472 = vmatprep.subr.mxu0 0.0
        %473 = vmatpush1.msra.mxu0 0.0
        %474 = vmatprep.subr.mxu0 0.0
        %475 = vmatpush1.msra.mxu0 0.0
        %476 = vmatprep.subr.mxu0 0.0
        %477 = vmatpush1.msra.mxu0 0.0
        %478 = vmatprep.subr.mxu0 0.0
        %479 = vmatpush1.msra.mxu0 0.0
        %480 = vmatprep.subr.mxu0 0.0
        %481 = vmatpush1.msra.mxu0 0.0
        %482 = vmatprep.subr.mxu0 0.0
        %483 = vmatpush1.msra.mxu0 0.0
        %484 = vmatprep.mubr.f32.mxu0 0.0
        %485 = vmatmul.mubr.f32.gmra.mrb[0].mxu0 %v338
        %v486 = vpop.f32.mrb[0].mxu0
        %v487 = vadd.f32 %v418, %v486
        %v488 = vpop.f32.mrb[0].mxu0
        %489 = vdwg.mxu0
        %490 = vst [vmem:[%s325] sm:$0xff] %v487
        %s491 = sand.u32 %s162, 1
        %s492 = scalar_lea.sflag [#allocation4], %s491
        %s493 = sand.u32 %s162, 1
        %s494 = smul.addr %s493, 8
        %s495 = scalar_lea.vmem [#allocation8], %s494
        %s496 = sand.u32 %s190, 1
        %s497 = scalar_lea.sflag [#allocation10], %s496
        %s498 = sand.u32 %s190, 1
        %s499 = smul.addr %s498, 8
        %s500 = scalar_lea.vmem [#allocation9], %s499
        // Predicated region
        $region53: #{tpu_custom_call.1} parent=39 // pred_check
          %p501 = pneg %p172
        $region54: #{tpu_custom_call.1} parent=39 // pred_check_branch
          %503 = sbr.rel (%p501) target = $region56
        $region55: #{tpu_custom_call.1} parent=39 // pred_region
          %s505 = ssub.s32 128, 128
          %506 = vsyncadd %s492, %s505
          %s507 = sadd.s32 %s33, %s32
          %s508 = smul.addr %s507, 128
          %s509 = scalar_lea.hbm %s5, %s508
          %s511 = sshll.u32 %s495, 4
          %s512 = int_to_ptr.vmem [resolvable:$true] %s511
          %514 = dma.vmem_to_hbm [thread:$0]  %s512, 128, %s509, %s492
        $region56: #{tpu_custom_call.1} parent=39 // pred_fallthru
          _
        // Predicated region
        $region57: #{tpu_custom_call.1} parent=39 // pred_check
          %p515 = pneg %p200
        $region58: #{tpu_custom_call.1} parent=39 // pred_check_branch
          %517 = sbr.rel (%p515) target = $region60
        $region59: #{tpu_custom_call.1} parent=39 // pred_region
          %s519 = ssub.s32 128, 128
          %520 = vsyncadd %s497, %s519
          %s521 = sadd.s32 %s33, %s32
          %s522 = smul.addr %s521, 128
          %s523 = scalar_lea.hbm %s6, %s522
          %s525 = sshll.u32 %s500, 4
          %s526 = int_to_ptr.vmem [resolvable:$true] %s525
          %528 = dma.vmem_to_hbm [thread:$0]  %s526, 128, %s523, %s497
        $region60: #{tpu_custom_call.1} parent=39 // pred_fallthru
          _
      $region40: #{tpu_custom_call.1} parent=5 // pred_fallthru
        _
      %p529 = scmp.le.s32.totalorder 2, %s23
      // Predicated region
      $region61: #{tpu_custom_call.1} parent=5 // pred_check
        %p530 = pneg %p529
      $region62: #{tpu_custom_call.1} parent=5 // pred_check_branch
        %532 = sbr.rel (%p530) target = $region64
      $region63: #{tpu_custom_call.1} parent=5 // pred_region
        %s533 = ssub.s32 %s23, 2
        // Predicated region
        $region65: #{tpu_custom_call.1} parent=63 // pred_check
          %p534 = pneg %p178
        $region66: #{tpu_custom_call.1} parent=63 // pred_check_branch
          %536 = sbr.rel (%p534) target = $region68
        $region67: #{tpu_custom_call.1} parent=63 // pred_region
          %s537 = sand.u32 %s163, 1
          %s538 = scalar_lea.sflag [#allocation4], %s537
          %s539 = sand.u32 %s163, 1
          %s540 = smul.addr %s539, 8
          %s541 = scalar_lea.vmem [#allocation8], %s540
          %542 = dma.done %s538, 128
        $region68: #{tpu_custom_call.1} parent=63 // pred_fallthru
          _
        // Predicated region
        $region69: #{tpu_custom_call.1} parent=63 // pred_check
          %p543 = pneg %p206
        $region70: #{tpu_custom_call.1} parent=63 // pred_check_branch
          %545 = sbr.rel (%p543) target = $region72
        $region71: #{tpu_custom_call.1} parent=63 // pred_region
          %s546 = sand.u32 %s191, 1
          %s547 = scalar_lea.sflag [#allocation10], %s546
          %s548 = sand.u32 %s191, 1
          %s549 = smul.addr %s548, 8
          %s550 = scalar_lea.vmem [#allocation9], %s549
          %551 = dma.done %s547, 128
        $region72: #{tpu_custom_call.1} parent=63 // pred_fallthru
          _
      $region64: #{tpu_custom_call.1} parent=5 // pred_fallthru
        _
    $region6: #{tpu_custom_call.1} parent=1 // loop_footer
      %s27 = sadd.s32 1, %s23
    $region7: #{tpu_custom_call.1} parent=1 // loop_footer_branch
      %22 = sbr.rel target = $region3
    $region8: #{tpu_custom_call.1} parent=1 // loop_exit
      _
    %552 = vsyncpa [#allocation3], 1
    %s553 = scalar_lea.sflag [#allocation3], 1
    %554 = vsyncpa %s553, 1
    %555 = vsyncpa [#allocation6], 1
    %556 = vsyncpa [#allocation4], 1
    %s557 = scalar_lea.sflag [#allocation4], 1
    %558 = vsyncpa %s557, 1
    %559 = vsyncpa [#allocation10], 1
    %s560 = scalar_lea.sflag [#allocation10], 1
    %561 = vsyncpa %s560, 1

</llo_original>
